<compile_context>
chip_gen: v5e
topology: v5e:2x2
jax: 0.10.0
libtpu: 0.0.40
codegen_flags: <defaults>
</compile_context>

<pallas_src>
import jax
import jax.numpy as jnp
from jax.experimental import pallas as pl
from jax.experimental.pallas import tpu as pltpu

LANE = 128  # pad the class axis to a multiple of this for lane-dense stores


def mlp_softmax_kernel(x_ref, w1_ref, b1_ref, w2_ref, b2_ref, o_ref):
    # fc1: bf16 MXU matmul, f32 accumulation; bias + ReLU in f32.
    h = jnp.dot(x_ref[...], w1_ref[...], preferred_element_type=jnp.float32)
    h = jnp.maximum(h + b1_ref[...], 0.0)                  # (tb, H) + (1, H)
    # fc2: cast activations back to bf16 for the MXU, accumulate in f32.
    logits = jnp.dot(h.astype(w2_ref.dtype), w2_ref[...],
                     preferred_element_type=jnp.float32)
    logits = logits + b2_ref[...]                          # padded classes get -1e30
    # softmax over the class axis (last axis); padded lanes underflow to 0.
    m = jnp.max(logits, axis=-1, keepdims=True)
    e = jnp.exp(logits - m)
    denom = jnp.sum(e, axis=-1, keepdims=True)
    o_ref[...] = (e * pl.reciprocal(denom, approx=True)).astype(o_ref.dtype)


def institude_aware_forward(x, w1, b1, w2, b2, *, tb=128):
    """x: (B, F) f32. w1: (F, H), b1: (H,), w2: (H, C), b2: (C,) (in, out) layout."""
    B, F = x.shape
    H = w1.shape[1]
    C = w2.shape[1]

    # --- Lane-dense output: pad class axis to a multiple of 128. ---
    Cp = max(LANE, ((C + LANE - 1) // LANE) * LANE)
    w2p = jnp.zeros((H, Cp), jnp.float32).at[:, :C].set(w2)
    b2p = jnp.full((1, Cp), -1e30, jnp.float32).at[0, :C].set(b2.reshape(-1))
    b1p = b1.reshape(1, H).astype(jnp.float32)

    # --- bf16 MXU operands (f32 accumulation inside the kernel). ---
    xb = x.astype(jnp.bfloat16)
    w1b = w1.astype(jnp.bfloat16)
    w2b = w2p.astype(jnp.bfloat16)

    # --- Batch tiling: tb multiple of 8, pad B up to a multiple of tb. ---
    tb = min(tb, max(8, ((B + 7) // 8) * 8))
    Bp = ((B + tb - 1) // tb) * tb
    if Bp != B:
        xb = jnp.zeros((Bp, F), xb.dtype).at[:B].set(xb)

    cost = pl.CostEstimate(
        flops=2 * Bp * (F * H + H * Cp),
        transcendentals=Bp * Cp,
        bytes_accessed=(xb.size * 2 + w1b.size * 2 + w2b.size * 2
                        + b1p.size * 4 + b2p.size * 4 + Bp * Cp * 4),
    )

    out = pl.pallas_call(
        mlp_softmax_kernel,
        out_shape=jax.ShapeDtypeStruct((Bp, Cp), jnp.float32),
        grid_spec=pltpu.PrefetchScalarGridSpec(
            num_scalar_prefetch=0,
            grid=(Bp // tb,),
            in_specs=[
                pl.BlockSpec((tb, F), lambda i: (i, 0)),   # x tile over batch
                pl.BlockSpec((F, H), lambda i: (0, 0)),    # full w1 (bf16)
                pl.BlockSpec((1, H), lambda i: (0, 0)),    # full b1 (f32)
                pl.BlockSpec((H, Cp), lambda i: (0, 0)),   # full padded w2 (bf16)
                pl.BlockSpec((1, Cp), lambda i: (0, 0)),   # full padded b2 (f32)
            ],
            out_specs=pl.BlockSpec((tb, Cp), lambda i: (i, 0)),
        ),
        compiler_params=pltpu.CompilerParams(
            dimension_semantics=("parallel",)),
        cost_estimate=cost,
    )(xb, w1b, b1p, w2b, b2p)

    return out[:B, :C]


def reference_forward_f32(x, w1, b1, w2, b2):
    h = jnp.maximum(x @ w1 + b1.reshape(1, -1), 0.0)
    logits = h @ w2 + b2.reshape(1, -1)
    return jax.nn.softmax(logits, axis=1)


def reference_forward_bf16(x, w1, b1, w2, b2):
    # Emulates the kernel numerics: bf16 MXU operands, f32 accumulation.
    h = jnp.dot(x.astype(jnp.bfloat16), w1.astype(jnp.bfloat16),
                preferred_element_type=jnp.float32)
    h = jnp.maximum(h + b1.reshape(1, -1), 0.0)
    logits = jnp.dot(h.astype(jnp.bfloat16), w2.astype(jnp.bfloat16),
                     preferred_element_type=jnp.float32)
    logits = logits + b2.reshape(1, -1)
    return jax.nn.softmax(logits, axis=1)


if __name__ == "__main__":
    key = jax.random.PRNGKey(0)
    # B=256 with tb=128 -> grid=(2,), so the "parallel" axis shards across both
    # TensorCores on v7x while staying tiny (weights ~100 KB, x ~32 KB).
    B, in_features, hidden, num_classes = 256, 32, 512, 16

    kx, k1, k1b, k2, k2b = jax.random.split(key, 5)
    x = jax.random.normal(kx, (B, in_features), dtype=jnp.float32)
    w1 = jax.random.normal(k1, (in_features, hidden), dtype=jnp.float32) * 0.05
    b1 = jax.random.normal(k1b, (hidden,), dtype=jnp.float32) * 0.05
    w2 = jax.random.normal(k2, (hidden, num_classes), dtype=jnp.float32) * 0.05
    b2 = jax.random.normal(k2b, (num_classes,), dtype=jnp.float32) * 0.05

    out = jax.block_until_ready(
        institude_aware_forward(x, w1, b1, w2, b2, tb=128))

    ref16 = reference_forward_bf16(x, w1, b1, w2, b2)
    ref32 = reference_forward_f32(x, w1, b1, w2, b2)

    assert out.shape == (B, num_classes)
    assert bool(jnp.all(jnp.isfinite(out)))
    # Same numerics path (bf16 MXU operands, f32 accumulation): tight match.
    assert jnp.allclose(out, ref16, atol=2e-3, rtol=2e-3), \
        float(jnp.max(jnp.abs(out - ref16)))
    # Against the pure-f32 reference: bf16-rounding tolerance.
    assert jnp.allclose(out, ref32, atol=2e-2, rtol=2e-2), \
        float(jnp.max(jnp.abs(out - ref32)))
    # Rows sum to 1 up to the approx-reciprocal error (~1e-3 relative).
    assert jnp.allclose(jnp.sum(out, axis=1), 1.0, atol=5e-3)

    print("KERNEL_OK")
</pallas_src>

<mosaic_0001>
module attributes {stable_mosaic.version = 11 : i64} {
  func.func @mlp_softmax_kernel(%arg0: i32, %arg1: memref<128x32xbf16, #tpu.memory_space<vmem>>, %arg2: memref<32x512xbf16, #tpu.memory_space<vmem>>, %arg3: memref<1x512xf32, #tpu.memory_space<vmem>>, %arg4: memref<512x128xbf16, #tpu.memory_space<vmem>>, %arg5: memref<1x128xf32, #tpu.memory_space<vmem>>, %arg6: memref<128x128xf32, #tpu.memory_space<vmem>>) attributes {dimension_semantics = [#tpu.dimension_semantics<parallel>], iteration_bounds = array<i64: 2>, scalar_prefetch = 0 : i64, scratch_operands = 0 : i64, tpu.core_type = #tpu.core_type<tc>, window_params = [{transform_indices = @transform_0, window_bounds = array<i64: 128, 32>}, {pipeline_mode = #tpu.pipeline_mode<synchronous>, transform_indices = @transform_1, window_bounds = array<i64: 32, 512>}, {pipeline_mode = #tpu.pipeline_mode<synchronous>, transform_indices = @transform_2, window_bounds = array<i64: 1, 512>}, {pipeline_mode = #tpu.pipeline_mode<synchronous>, transform_indices = @transform_3, window_bounds = array<i64: 512, 128>}, {pipeline_mode = #tpu.pipeline_mode<synchronous>, transform_indices = @transform_4, window_bounds = array<i64: 1, 128>}, {transform_indices = @transform_5, window_bounds = array<i64: 128, 128>}]} {
    %c0 = arith.constant 0 : index
    %c0_0 = arith.constant 0 : index
    %0 = vector.load %arg1[%c0, %c0_0] : memref<128x32xbf16, #tpu.memory_space<vmem>>, vector<128x32xbf16>
    %c0_1 = arith.constant 0 : index
    %c0_2 = arith.constant 0 : index
    %1 = vector.load %arg2[%c0_1, %c0_2] : memref<32x512xbf16, #tpu.memory_space<vmem>>, vector<32x512xbf16>
    %cst = arith.constant dense<0.000000e+00> : vector<128x512xf32>
    %2 = tpu.matmul %0, %1, %cst {dimension_numbers = #tpu.dot_dimension_numbers<[1], [0], [0], [1], [0, 0, 1, 1], [], []>} : vector<128x32xbf16>, vector<32x512xbf16>, vector<128x512xf32> -> vector<128x512xf32>
    %c0_3 = arith.constant 0 : index
    %c0_4 = arith.constant 0 : index
    %3 = vector.load %arg3[%c0_3, %c0_4] : memref<1x512xf32, #tpu.memory_space<vmem>>, vector<1x512xf32>
    %4 = vector.broadcast %3 : vector<1x512xf32> to vector<128x512xf32>
    %5 = arith.addf %2, %4 : vector<128x512xf32>
    %cst_5 = arith.constant 0.000000e+00 : f32
    %6 = vector.broadcast %cst_5 : f32 to vector<128x512xf32>
    %7 = arith.maximumf %5, %6 : vector<128x512xf32>
    %8 = arith.truncf %7 : vector<128x512xf32> to vector<128x512xbf16>
    %c0_6 = arith.constant 0 : index
    %c0_7 = arith.constant 0 : index
    %9 = vector.load %arg4[%c0_6, %c0_7] : memref<512x128xbf16, #tpu.memory_space<vmem>>, vector<512x128xbf16>
    %cst_8 = arith.constant dense<0.000000e+00> : vector<128x128xf32>
    %10 = tpu.matmul %8, %9, %cst_8 {dimension_numbers = #tpu.dot_dimension_numbers<[1], [0], [0], [1], [0, 0, 1, 1], [], []>} : vector<128x512xbf16>, vector<512x128xbf16>, vector<128x128xf32> -> vector<128x128xf32>
    %c0_9 = arith.constant 0 : index
    %c0_10 = arith.constant 0 : index
    %11 = vector.load %arg5[%c0_9, %c0_10] : memref<1x128xf32, #tpu.memory_space<vmem>>, vector<1x128xf32>
    %12 = vector.broadcast %11 : vector<1x128xf32> to vector<128x128xf32>
    %13 = arith.addf %10, %12 : vector<128x128xf32>
    %cst_11 = arith.constant dense<0xFF800000> : vector<128xf32>
    %14 = vector.multi_reduction <maximumf>, %13, %cst_11 [1] : vector<128x128xf32> to vector<128xf32>
    %15 = vector.shape_cast %14 : vector<128xf32> to vector<128x1xf32>
    %16 = vector.broadcast %15 : vector<128x1xf32> to vector<128x128xf32>
    %17 = arith.subf %13, %16 : vector<128x128xf32>
    %18 = math.exp %17 : vector<128x128xf32>
    %cst_12 = arith.constant dense<0.000000e+00> : vector<128xf32>
    %19 = vector.multi_reduction <add>, %18, %cst_12 [1] : vector<128x128xf32> to vector<128xf32>
    %20 = vector.shape_cast %19 : vector<128xf32> to vector<128x1xf32>
    %21 = tpu.reciprocal %20 {approx = true} : vector<128x1xf32> -> vector<128x1xf32>
    %22 = vector.broadcast %21 : vector<128x1xf32> to vector<128x128xf32>
    %23 = arith.mulf %18, %22 : vector<128x128xf32>
    %c0_13 = arith.constant 0 : index
    %c0_14 = arith.constant 0 : index
    %24 = vector.load %arg6[%c0_13, %c0_14] : memref<128x128xf32, #tpu.memory_space<vmem>>, vector<128x128xf32>
    tpu.vector_store %arg6[%c0_13, %c0_14], %23 {strides = array<i32>} : memref<128x128xf32, #tpu.memory_space<vmem>>, vector<128x128xf32>,
    return
  }
  func.func @transform_0(%arg0: i32) -> (i32, i32) {
    %c0_i32 = arith.constant 0 : i32
    %c0_i32_0 = arith.constant 0 : i32
    return %arg0, %c0_i32 : i32, i32
  }
  func.func @transform_1(%arg0: i32) -> (i32, i32) {
    %c0_i32 = arith.constant 0 : i32
    %c0_i32_0 = arith.constant 0 : i32
    %c0_i32_1 = arith.constant 0 : i32
    return %c0_i32, %c0_i32_0 : i32, i32
  }
  func.func @transform_2(%arg0: i32) -> (i32, i32) {
    %c0_i32 = arith.constant 0 : i32
    %c0_i32_0 = arith.constant 0 : i32
    %c0_i32_1 = arith.constant 0 : i32
    return %c0_i32, %c0_i32_0 : i32, i32
  }
  func.func @transform_3(%arg0: i32) -> (i32, i32) {
    %c0_i32 = arith.constant 0 : i32
    %c0_i32_0 = arith.constant 0 : i32
    %c0_i32_1 = arith.constant 0 : i32
    return %c0_i32, %c0_i32_0 : i32, i32
  }
  func.func @transform_4(%arg0: i32) -> (i32, i32) {
    %c0_i32 = arith.constant 0 : i32
    %c0_i32_0 = arith.constant 0 : i32
    %c0_i32_1 = arith.constant 0 : i32
    return %c0_i32, %c0_i32_0 : i32, i32
  }
  func.func @transform_5(%arg0: i32) -> (i32, i32) {
    %c0_i32 = arith.constant 0 : i32
    %c0_i32_0 = arith.constant 0 : i32
    return %arg0, %c0_i32 : i32, i32
  }
}

</mosaic_0001>

<llo_original>
// kernel: tpu_custom_call.1
$region0: #{tpu_custom_call.1}
  #allocation0 [shape = 'u32[]', space=smem, size = 0x4, offset = 0x4, fixed_abs, tag = 'smem constant byte address 0x4 - core index']
  #allocation1 [shape = 'u32[72,128]{1,0:T(1,128)}', space=vmem, size = 0x9000, scoped, tag = 'internal scratch']
  %s0 = inlined_call_operand.vmem [shape: bf16[256,32], index: 0, kind: input, shape index: {}]
  %s1 = inlined_call_operand.vmem [shape: bf16[32,512], index: 1, kind: input, shape index: {}]
  %s2 = inlined_call_operand.vmem [shape: f32[1,512], index: 2, kind: input, shape index: {}]
  %s3 = inlined_call_operand.hbm [shape: bf16[512,128], index: 3, kind: input, shape index: {}]
  %s4 = inlined_call_operand.vmem [shape: f32[1,128], index: 4, kind: input, shape index: {}]
  %s5 = inlined_call_operand.hbm [shape: f32[256,128], index: 5, kind: output, shape index: {}]
  %s6 = sld [smem:[#allocation0]]
  $region57: #{tpu_custom_call.1} parent=0
    _
  %s8 = ssub.s32 1, %s6
  %s9 = scalar_select 0, %s8, %s6
  $region1: #{tpu_custom_call.1} parent=0
    #allocation2 [shape = 'u8[131072]{0}', space=vmem, size = 0x20000, scoped, tag = 'input window, operand 3, single buffered']
    #allocation3 [shape = 's32[2]{0}', space=sflag, size = 0x8, scoped, tag = 'scoped memory for tpu_custom_call.1']
    #allocation4 [shape = 's32[2]{0}', space=sflag, size = 0x8, scoped, tag = 'scoped memory for tpu_custom_call.1']
    #allocation5 [shape = 'u8[131072]{0}', space=vmem, size = 0x20000, scoped, tag = 'output window, operand 0']
    %10 = vsyncpa [#allocation3], 0
    %11 = vsyncpa [#allocation4], 0
    %s12 = scalar_lea.sflag [#allocation4], 1
    %13 = vsyncpa %s12, 0
    loop: start=0, step=1, limit=4
    $region2: #{tpu_custom_call.1} parent=1 // loop_pre_header
      _
    $region3: #{tpu_custom_call.1} parent=1 // loop_header
      %s15 = sphi 0, %s19
      %p16 = scmp.ge.s32.totalorder %s15, 4
      %s25 = sphi 0, %s27
      %s28 = sphi 0, %s25
      %s29 = sphi 0, %s28
      %s45 = sphi 0, %s29
      %s49 = sphi 0, %s49
      %s51 = sphi 0, %s49
      %s52 = sphi 0, %s51
      %s66 = sphi 0, %s52
      %s70 = sphi 0, %s70
      %s72 = sphi 0, %s70
      %s73 = sphi 0, %s72
      %s87 = sphi 0, %s73
      %s91 = sphi 0, %s91
      %s93 = sphi 0, %s91
      %s94 = sphi 0, %s93
      %s108 = sphi 0, %s94
      %s112 = sphi 0, %s112
      %s114 = sphi 0, %s112
      %s115 = sphi 0, %s114
      %s129 = sphi 0, %s115
      %s135 = sphi 0, %s137
      %s138 = sphi 0, %s135
      %s139 = sphi 0, %s138
      %s155 = sphi 0, %s139
    $region4: #{tpu_custom_call.1} parent=1 // loop_header_branch
      %18 = sbr.rel (%p16) target = $region8
    $region5: #{tpu_custom_call.1} parent=1 // loop_body
      %s20 = ssub.s32 %s15, 1
      %s21 = ssub.s32 %s15, 2
      %s22 = sadd.s32 %s15, 1
      %s23 = ssub.s32 %s15, %s22
      %p24 = scmp.eq.s32.totalorder %s23, 0
      %s26 = sadd.s32 %s25, 1
      %s27 = scalar_select %p24, %s25, %s26
      %p30 = pneg %p24
      %p31 = scmp.eq.s32.totalorder %s15, 1
      %p32 = por %p30, %p31
      %p33 = scmp.ne.s32.totalorder %s25, %s28
      %p34 = scmp.eq.s32.totalorder %s15, 0
      %p35 = por %p33, %p34
      %p36 = scmp.ne.s32.totalorder %s25, %s28
      %p37 = scmp.eq.s32.totalorder %s20, 1
      %p38 = por %p36, %p37
      %p39 = scmp.ne.s32.totalorder %s28, %s29
      %p40 = scmp.eq.s32.totalorder %s20, 0
      %p41 = por %p39, %p40
      %p42 = scmp.ne.s32.totalorder %s28, %s29
      %p43 = scmp.eq.s32.totalorder %s21, 1
      %p44 = por %p42, %p43
      %p46 = scmp.ne.s32.totalorder %s29, %s45
      %p47 = scmp.eq.s32.totalorder %s21, 0
      %p48 = por %p46, %p47
      %s50 = sadd.s32 %s49, 1
      %p53 = scmp.eq.s32.totalorder %s15, 1
      %p54 = scmp.ne.s32.totalorder %s49, %s51
      %p55 = scmp.eq.s32.totalorder %s15, 0
      %p56 = por %p54, %p55
      %p57 = scmp.ne.s32.totalorder %s49, %s51
      %p58 = scmp.eq.s32.totalorder %s20, 1
      %p59 = por %p57, %p58
      %p60 = scmp.ne.s32.totalorder %s51, %s52
      %p61 = scmp.eq.s32.totalorder %s20, 0
      %p62 = por %p60, %p61
      %p63 = scmp.ne.s32.totalorder %s51, %s52
      %p64 = scmp.eq.s32.totalorder %s21, 1
      %p65 = por %p63, %p64
      %p67 = scmp.ne.s32.totalorder %s52, %s66
      %p68 = scmp.eq.s32.totalorder %s21, 0
      %p69 = por %p67, %p68
      %s71 = sadd.s32 %s70, 1
      %p74 = scmp.eq.s32.totalorder %s15, 1
      %p75 = scmp.ne.s32.totalorder %s70, %s72
      %p76 = scmp.eq.s32.totalorder %s15, 0
      %p77 = por %p75, %p76
      %p78 = scmp.ne.s32.totalorder %s70, %s72
      %p79 = scmp.eq.s32.totalorder %s20, 1
      %p80 = por %p78, %p79
      %p81 = scmp.ne.s32.totalorder %s72, %s73
      %p82 = scmp.eq.s32.totalorder %s20, 0
      %p83 = por %p81, %p82
      %p84 = scmp.ne.s32.totalorder %s72, %s73
      %p85 = scmp.eq.s32.totalorder %s21, 1
      %p86 = por %p84, %p85
      %p88 = scmp.ne.s32.totalorder %s73, %s87
      %p89 = scmp.eq.s32.totalorder %s21, 0
      %p90 = por %p88, %p89
      %s92 = sadd.s32 %s91, 1
      %p95 = scmp.eq.s32.totalorder %s15, 1
      %p96 = scmp.ne.s32.totalorder %s91, %s93
      %p97 = scmp.eq.s32.totalorder %s15, 0
      %p98 = por %p96, %p97
      %p99 = scmp.ne.s32.totalorder %s91, %s93
      %p100 = scmp.eq.s32.totalorder %s20, 1
      %p101 = por %p99, %p100
      %p102 = scmp.ne.s32.totalorder %s93, %s94
      %p103 = scmp.eq.s32.totalorder %s20, 0
      %p104 = por %p102, %p103
      %p105 = scmp.ne.s32.totalorder %s93, %s94
      %p106 = scmp.eq.s32.totalorder %s21, 1
      %p107 = por %p105, %p106
      %p109 = scmp.ne.s32.totalorder %s94, %s108
      %p110 = scmp.eq.s32.totalorder %s21, 0
      %p111 = por %p109, %p110
      %s113 = sadd.s32 %s112, 1
      %p116 = scmp.eq.s32.totalorder %s15, 1
      %p117 = scmp.ne.s32.totalorder %s112, %s114
      %p118 = scmp.eq.s32.totalorder %s15, 0
      %p119 = por %p117, %p118
      %p120 = scmp.ne.s32.totalorder %s112, %s114
      %p121 = scmp.eq.s32.totalorder %s20, 1
      %p122 = por %p120, %p121
      %p123 = scmp.ne.s32.totalorder %s114, %s115
      %p124 = scmp.eq.s32.totalorder %s20, 0
      %p125 = por %p123, %p124
      %p126 = scmp.ne.s32.totalorder %s114, %s115
      %p127 = scmp.eq.s32.totalorder %s21, 1
      %p128 = por %p126, %p127
      %p130 = scmp.ne.s32.totalorder %s115, %s129
      %p131 = scmp.eq.s32.totalorder %s21, 0
      %p132 = por %p130, %p131
      %s133 = ssub.s32 %s15, %s22
      %p134 = scmp.eq.s32.totalorder %s133, 0
      %s136 = sadd.s32 %s135, 1
      %s137 = scalar_select %p134, %s135, %s136
      %p140 = pneg %p134
      %p141 = scmp.eq.s32.totalorder %s15, 1
      %p142 = por %p140, %p141
      %p143 = scmp.ne.s32.totalorder %s135, %s138
      %p144 = scmp.eq.s32.totalorder %s15, 0
      %p145 = por %p143, %p144
      %p146 = scmp.ne.s32.totalorder %s135, %s138
      %p147 = scmp.eq.s32.totalorder %s20, 1
      %p148 = por %p146, %p147
      %p149 = scmp.ne.s32.totalorder %s138, %s139
      %p150 = scmp.eq.s32.totalorder %s20, 0
      %p151 = por %p149, %p150
      %p152 = scmp.ne.s32.totalorder %s138, %s139
      %p153 = scmp.eq.s32.totalorder %s21, 1
      %p154 = por %p152, %p153
      %p156 = scmp.ne.s32.totalorder %s139, %s155
      %p157 = scmp.eq.s32.totalorder %s21, 0
      %p158 = por %p156, %p157
      %p159 = scmp.le.s32.totalorder 1, %s15
      %p160 = scmp.lt.s32.totalorder %s15, 3
      %p161 = pnand %p159, %p160
      %p162 = pneg %p161
      // Predicated region
      $region9: #{tpu_custom_call.1} parent=5 // pred_check
        _
      $region10: #{tpu_custom_call.1} parent=5 // pred_check_branch
        %164 = sbr.rel (%p161) target = $region12
      $region11: #{tpu_custom_call.1} parent=5 // pred_region
        %s165 = ssub.s32 %s15, 1
        // Predicated region
        $region13: #{tpu_custom_call.1} parent=11 // pred_check
          %p166 = pneg %p62
        $region14: #{tpu_custom_call.1} parent=11 // pred_check_branch
          %168 = sbr.rel (%p166) target = $region16
        $region15: #{tpu_custom_call.1} parent=11 // pred_region
          _
        $region16: #{tpu_custom_call.1} parent=11 // pred_fallthru
          _
        // Predicated region
        $region17: #{tpu_custom_call.1} parent=11 // pred_check
          %p169 = pneg %p83
        $region18: #{tpu_custom_call.1} parent=11 // pred_check_branch
          %171 = sbr.rel (%p169) target = $region20
        $region19: #{tpu_custom_call.1} parent=11 // pred_region
          _
        $region20: #{tpu_custom_call.1} parent=11 // pred_fallthru
          _
        // Predicated region
        $region21: #{tpu_custom_call.1} parent=11 // pred_check
          %p172 = pneg %p104
        $region22: #{tpu_custom_call.1} parent=11 // pred_check_branch
          %174 = sbr.rel (%p172) target = $region24
        $region23: #{tpu_custom_call.1} parent=11 // pred_region
          %176 = vsyncadd [#allocation3], 0
          %s177 = sshll.u32 %s3, 4
          %s178 = int_to_ptr.hbm [resolvable:$true] %s177
          %s179 = sshll.u32 [#allocation2], 4
          %s180 = int_to_ptr.vmem [resolvable:$true] %s179
          %185 = dma.hbm_to_vmem [thread:$0]  %s178, 4096, %s180, [#allocation3], 64, 64, 4
        $region24: #{tpu_custom_call.1} parent=11 // pred_fallthru
          _
        // Predicated region
        $region25: #{tpu_custom_call.1} parent=11 // pred_check
          %p186 = pneg %p125
        $region26: #{tpu_custom_call.1} parent=11 // pred_check_branch
          %188 = sbr.rel (%p186) target = $region28
        $region27: #{tpu_custom_call.1} parent=11 // pred_region
          _
        $region28: #{tpu_custom_call.1} parent=11 // pred_fallthru
          _
      $region12: #{tpu_custom_call.1} parent=5 // pred_fallthru
        _
      %p189 = scmp.lt.s32.totalorder %s15, 2
      // Predicated region
      $region29: #{tpu_custom_call.1} parent=5 // pred_check
        %p190 = pneg %p189
      $region30: #{tpu_custom_call.1} parent=5 // pred_check_branch
        %192 = sbr.rel (%p190) target = $region32
      $region31: #{tpu_custom_call.1} parent=5 // pred_region
        // Predicated region
        $region33: #{tpu_custom_call.1} parent=31 // pred_check
          %p193 = pneg %p35
        $region34: #{tpu_custom_call.1} parent=31 // pred_check_branch
          %195 = sbr.rel (%p193) target = $region36
        $region35: #{tpu_custom_call.1} parent=31 // pred_region
          %s196 = smul.u32 16, %s15
          %p197 = scmp.lt.s32.totalorder %s196, 31
          %s198 = scalar_select %p197, %s196, 31
          %s199 = smul.addr %s198, 4
          %s200 = scalar_lea.vmem %s0, %s199
          %s201 = smul.u32 16, %s15
        $region36: #{tpu_custom_call.1} parent=31 // pred_fallthru
          _
      $region32: #{tpu_custom_call.1} parent=5 // pred_fallthru
        _
      %p202 = scmp.le.s32.totalorder 1, %s15
      %p203 = scmp.lt.s32.totalorder %s15, 3
      %p204 = pnand %p202, %p203
      %p205 = pneg %p204
      // Predicated region
      $region37: #{tpu_custom_call.1} parent=5 // pred_check
        _
      $region38: #{tpu_custom_call.1} parent=5 // pred_check_branch
        %207 = sbr.rel (%p204) target = $region40
      $region39: #{tpu_custom_call.1} parent=5 // pred_region
        %s208 = ssub.s32 %s15, 1
        // Predicated region
        $region41: #{tpu_custom_call.1} parent=39 // pred_check
          %p209 = pneg %p104
        $region42: #{tpu_custom_call.1} parent=39 // pred_check_branch
          %211 = sbr.rel (%p209) target = $region44
        $region43: #{tpu_custom_call.1} parent=39 // pred_region
          %213 = dma.done [#allocation3], 4096
        $region44: #{tpu_custom_call.1} parent=39 // pred_fallthru
          _
        %s214 = smul.u32 16, %s20
        %p215 = scmp.lt.s32.totalorder %s214, 31
        %s216 = scalar_select %p215, %s214, 31
        %s217 = smul.addr %s216, 4
        %s218 = scalar_lea.vmem %s0, %s217
        %p219 = pneg %p41
        %p220 = pneg %p38
        %p221 = pneg %p62
        %p222 = pneg %p59
        %p223 = pneg %p83
        %p224 = pneg %p80
        %p225 = pneg %p104
        %p226 = pneg %p101
        %p227 = pneg %p125
        %p228 = pneg %p122
        %p229 = pneg %p151
        %p230 = pneg %p148
        %s231 = sand.u32 %s138, 1
        %s232 = scalar_lea.sflag [#allocation4], %s231
        %s233 = sand.u32 %s138, 1
        %s234 = smul.addr %s233, 128
        %s235 = scalar_lea.vmem [#allocation5], %s234
        %s236 = smul.u32 16, %s20
        %p237 = scmp.lt.s32.totalorder %s236, 31
        %s238 = scalar_select %p237, %s236, 31
        %s239 = smul.addr %s238, 4
        %s240 = scalar_lea.vmem %s0, %s239
        %s241 = smul.u32 16, %s20
        %s242 = smul.u32 16, %s20
        %v244 = vld [vmem:[%s240] sm:$0xf]
        %v245 = vld [vmem:[%s240 + $0x4] sm:$0xf]
        %v246 = vld [vmem:[%s240 + $0x8] sm:$0xf]
        %v247 = vld [vmem:[%s240 + $0xc] sm:$0xf]
        %v248 = vld [vmem:[%s240 + $0x10] sm:$0xf]
        %v249 = vld [vmem:[%s240 + $0x14] sm:$0xf]
        %v250 = vld [vmem:[%s240 + $0x18] sm:$0xf]
        %v251 = vld [vmem:[%s240 + $0x1c] sm:$0xf]
        %v252 = vld [vmem:[%s240 + $0x20] sm:$0xf]
        %v253 = vld [vmem:[%s240 + $0x24] sm:$0xf]
        %v254 = vld [vmem:[%s240 + $0x28] sm:$0xf]
        %v255 = vld [vmem:[%s240 + $0x2c] sm:$0xf]
        %v256 = vld [vmem:[%s240 + $0x30] sm:$0xf]
        %v257 = vld [vmem:[%s240 + $0x34] sm:$0xf]
        %v258 = vld [vmem:[%s240 + $0x38] sm:$0xf]
        %v259 = vld [vmem:[%s240 + $0x3c] sm:$0xf]
        %v260 = vld [vmem:[%s1] sm:$0xff]
        %v261 = vld [vmem:[%s1 + $0x8] sm:$0xff]
        %v262 = vld [vmem:[%s1 + $0x10] sm:$0xff]
        %v263 = vld [vmem:[%s1 + $0x18] sm:$0xff]
        %v264 = vld [vmem:[%s1 + $0x20] sm:$0xff]
        %v265 = vld [vmem:[%s1 + $0x28] sm:$0xff]
        %v266 = vld [vmem:[%s1 + $0x30] sm:$0xff]
        %v267 = vld [vmem:[%s1 + $0x38] sm:$0xff]
        %v268 = vld [vmem:[%s2] sm:$0xf]
        %v270 = vperm.slane %v268, 0
        %v271 = vperm.slane %v268, 1
        %v272 = vperm.slane %v268, 2
        %v273 = vperm.slane %v268, 3
        %v294 = vunpack.c.l.b16 %v244
        %v295 = vunpack.c.l.b16 %v245
        %v296 = vunpack.c.l.b16 %v246
        %v297 = vunpack.c.l.b16 %v247
        %v298 = vunpack.c.l.b16 %v248
        %v299 = vunpack.c.l.b16 %v249
        %v300 = vunpack.c.l.b16 %v250
        %v301 = vunpack.c.l.b16 %v251
        %v302 = vunpack.c.l.b16 %v252
        %v303 = vunpack.c.l.b16 %v253
        %v304 = vunpack.c.l.b16 %v254
        %v305 = vunpack.c.l.b16 %v255
        %v306 = vunpack.c.l.b16 %v256
        %v307 = vunpack.c.l.b16 %v257
        %v308 = vunpack.c.l.b16 %v258
        %v309 = vunpack.c.l.b16 %v259
        %v310 = vpack.c.b16 %v295, %v294
        %v311 = vpack.c.b16 %v297, %v296
        %v312 = vpack.c.b16 %v299, %v298
        %v313 = vpack.c.b16 %v301, %v300
        %v314 = vpack.c.b16 %v303, %v302
        %v315 = vpack.c.b16 %v305, %v304
        %v316 = vpack.c.b16 %v307, %v306
        %v317 = vpack.c.b16 %v309, %v308
        %v326 = vunpack.c.l.b16 %v260
        %v327 = vunpack.c.h.b16 %v260
        %v328 = vunpack.c.l.b16 %v261
        %v329 = vunpack.c.h.b16 %v261
        %v330 = vunpack.c.l.b16 %v262
        %v331 = vunpack.c.h.b16 %v262
        %v332 = vunpack.c.l.b16 %v263
        %v333 = vunpack.c.h.b16 %v263
        %v334 = vunpack.c.l.b16 %v264
        %v335 = vunpack.c.h.b16 %v264
        %v336 = vunpack.c.l.b16 %v265
        %v337 = vunpack.c.h.b16 %v265
        %v338 = vunpack.c.l.b16 %v266
        %v339 = vunpack.c.h.b16 %v266
        %v340 = vunpack.c.l.b16 %v267
        %v341 = vunpack.c.h.b16 %v267
        %v342 = vpack.c.b16 %v330, %v326
        %v343 = vpack.c.b16 %v331, %v327
        %v344 = vpack.c.b16 %v332, %v328
        %v345 = vpack.c.b16 %v333, %v329
        %v346 = vpack.c.b16 %v338, %v334
        %v347 = vpack.c.b16 %v339, %v335
        %v348 = vpack.c.b16 %v340, %v336
        %v349 = vpack.c.b16 %v341, %v337
        %vm358 = vcmask 261120
        %v360 = vsel %vm358, %v310, 0
        %v363 = vsel %vm358, %v311, 0
        %v366 = vsel %vm358, %v312, 0
        %v369 = vsel %vm358, %v313, 0
        %v372 = vsel %vm358, %v314, 0
        %v375 = vsel %vm358, %v315, 0
        %v378 = vsel %vm358, %v316, 0
        %v381 = vsel %vm358, %v317, 0
        %383 = vmatpush.bf16.msra.mxu0 0
        %384 = vmatpush.bf16.msra.mxu0 0
        %385 = vmatpush.bf16.msra.mxu0 0
        %386 = vmatpush.bf16.msra.mxu0 0
        %387 = vmatpush.bf16.msra.mxu0 0
        %388 = vmatpush.bf16.msra.mxu0 0
        %389 = vmatpush.bf16.msra.mxu0 %v346
        %390 = vmatpush.bf16.msra.mxu0 %v342
        %391 = vmatmul.bf16.gmra.mxu0 %v360
        %v392 = vpop.f32.mrf.mxu0
        %v393 = vadd.f32 %v270, %v392
        %v394 = vpop.f32.mrf.mxu0
        %v395 = vadd.f32 %v270, %v394
        %396 = vmatmul.bf16.gmra.mxu0 %v363
        %v397 = vpop.f32.mrf.mxu0
        %v398 = vadd.f32 %v270, %v397
        %v399 = vpop.f32.mrf.mxu0
        %v400 = vadd.f32 %v270, %v399
        %401 = vmatmul.bf16.gmra.mxu0 %v366
        %v402 = vpop.f32.mrf.mxu0
        %v403 = vadd.f32 %v270, %v402
        %v404 = vpop.f32.mrf.mxu0
        %v405 = vadd.f32 %v270, %v404
        %406 = vmatmul.bf16.gmra.mxu0 %v369
        %v407 = vpop.f32.mrf.mxu0
        %v408 = vadd.f32 %v270, %v407
        %v409 = vpop.f32.mrf.mxu0
        %v410 = vadd.f32 %v270, %v409
        %411 = vmatmul.bf16.gmra.mxu0 %v372
        %v412 = vpop.f32.mrf.mxu0
        %v413 = vadd.f32 %v270, %v412
        %v414 = vpop.f32.mrf.mxu0
        %v415 = vadd.f32 %v270, %v414
        %416 = vmatmul.bf16.gmra.mxu0 %v375
        %v417 = vpop.f32.mrf.mxu0
        %v418 = vadd.f32 %v270, %v417
        %v419 = vpop.f32.mrf.mxu0
        %v420 = vadd.f32 %v270, %v419
        %421 = vmatmul.bf16.gmra.mxu0 %v378
        %v422 = vpop.f32.mrf.mxu0
        %v423 = vadd.f32 %v270, %v422
        %v424 = vpop.f32.mrf.mxu0
        %v425 = vadd.f32 %v270, %v424
        %426 = vmatmul.bf16.gmra.mxu0 %v381
        %v427 = vpop.f32.mrf.mxu0
        %v428 = vadd.f32 %v270, %v427
        %v429 = vpop.f32.mrf.mxu0
        %v430 = vadd.f32 %v270, %v429
        %431 = vdwg.mxu0
        %432 = vmatpush.bf16.msra.mxu0 0
        %433 = vmatpush.bf16.msra.mxu0 0
        %434 = vmatpush.bf16.msra.mxu0 0
        %435 = vmatpush.bf16.msra.mxu0 0
        %436 = vmatpush.bf16.msra.mxu0 0
        %437 = vmatpush.bf16.msra.mxu0 0
        %438 = vmatpush.bf16.msra.mxu0 %v347
        %439 = vmatpush.bf16.msra.mxu0 %v343
        %440 = vmatmul.bf16.gmra.mxu0 %v360
        %v441 = vpop.f32.mrf.mxu0
        %v442 = vadd.f32 %v271, %v441
        %v443 = vpop.f32.mrf.mxu0
        %v444 = vadd.f32 %v271, %v443
        %445 = vmatmul.bf16.gmra.mxu0 %v363
        %v446 = vpop.f32.mrf.mxu0
        %v447 = vadd.f32 %v271, %v446
        %v448 = vpop.f32.mrf.mxu0
        %v449 = vadd.f32 %v271, %v448
        %450 = vmatmul.bf16.gmra.mxu0 %v366
        %v451 = vpop.f32.mrf.mxu0
        %v452 = vadd.f32 %v271, %v451
        %v453 = vpop.f32.mrf.mxu0
        %v454 = vadd.f32 %v271, %v453
        %455 = vmatmul.bf16.gmra.mxu0 %v369
        %v456 = vpop.f32.mrf.mxu0
        %v457 = vadd.f32 %v271, %v456
        %v458 = vpop.f32.mrf.mxu0
        %v459 = vadd.f32 %v271, %v458
        %460 = vmatmul.bf16.gmra.mxu0 %v372
        %v461 = vpop.f32.mrf.mxu0
        %v462 = vadd.f32 %v271, %v461
        %v463 = vpop.f32.mrf.mxu0
        %v464 = vadd.f32 %v271, %v463
        %465 = vmatmul.bf16.gmra.mxu0 %v375
        %v466 = vpop.f32.mrf.mxu0
        %v467 = vadd.f32 %v271, %v466
        %v468 = vpop.f32.mrf.mxu0
        %v469 = vadd.f32 %v271, %v468
        %470 = vmatmul.bf16.gmra.mxu0 %v378
        %v471 = vpop.f32.mrf.mxu0
        %v472 = vadd.f32 %v271, %v471
        %v473 = vpop.f32.mrf.mxu0
        %v474 = vadd.f32 %v271, %v473
        %475 = vmatmul.bf16.gmra.mxu0 %v381
        %v476 = vpop.f32.mrf.mxu0
        %v477 = vadd.f32 %v271, %v476
        %v478 = vpop.f32.mrf.mxu0
        %v479 = vadd.f32 %v271, %v478
        %480 = vdwg.mxu0
        %481 = vmatpush.bf16.msra.mxu0 0
        %482 = vmatpush.bf16.msra.mxu0 0
        %483 = vmatpush.bf16.msra.mxu0 0
        %484 = vmatpush.bf16.msra.mxu0 0
        %485 = vmatpush.bf16.msra.mxu0 0
        %486 = vmatpush.bf16.msra.mxu0 0
        %487 = vmatpush.bf16.msra.mxu0 %v348
        %488 = vmatpush.bf16.msra.mxu0 %v344
        %489 = vmatmul.bf16.gmra.mxu0 %v360
        %v490 = vpop.f32.mrf.mxu0
        %v491 = vadd.f32 %v272, %v490
        %v492 = vpop.f32.mrf.mxu0
        %v493 = vadd.f32 %v272, %v492
        %494 = vmatmul.bf16.gmra.mxu0 %v363
        %v495 = vpop.f32.mrf.mxu0
        %v496 = vadd.f32 %v272, %v495
        %v497 = vpop.f32.mrf.mxu0
        %v498 = vadd.f32 %v272, %v497
        %499 = vmatmul.bf16.gmra.mxu0 %v366
        %v500 = vpop.f32.mrf.mxu0
        %v501 = vadd.f32 %v272, %v500
        %v502 = vpop.f32.mrf.mxu0
        %v503 = vadd.f32 %v272, %v502
        %504 = vmatmul.bf16.gmra.mxu0 %v369
        %v505 = vpop.f32.mrf.mxu0
        %v506 = vadd.f32 %v272, %v505
        %v507 = vpop.f32.mrf.mxu0
        %v508 = vadd.f32 %v272, %v507
        %509 = vmatmul.bf16.gmra.mxu0 %v372
        %v510 = vpop.f32.mrf.mxu0
        %v511 = vadd.f32 %v272, %v510
        %v512 = vpop.f32.mrf.mxu0
        %v513 = vadd.f32 %v272, %v512
        %514 = vmatmul.bf16.gmra.mxu0 %v375
        %v515 = vpop.f32.mrf.mxu0
        %v516 = vadd.f32 %v272, %v515
        %v517 = vpop.f32.mrf.mxu0
        %v518 = vadd.f32 %v272, %v517
        %519 = vmatmul.bf16.gmra.mxu0 %v378
        %v520 = vpop.f32.mrf.mxu0
        %v521 = vadd.f32 %v272, %v520
        %v522 = vpop.f32.mrf.mxu0
        %v523 = vadd.f32 %v272, %v522
        %524 = vmatmul.bf16.gmra.mxu0 %v381
        %v525 = vpop.f32.mrf.mxu0
        %v526 = vadd.f32 %v272, %v525
        %v527 = vpop.f32.mrf.mxu0
        %v528 = vadd.f32 %v272, %v527
        %529 = vdwg.mxu0
        %530 = vmatpush.bf16.msra.mxu0 0
        %531 = vmatpush.bf16.msra.mxu0 0
        %532 = vmatpush.bf16.msra.mxu0 0
        %533 = vmatpush.bf16.msra.mxu0 0
        %534 = vmatpush.bf16.msra.mxu0 0
        %535 = vmatpush.bf16.msra.mxu0 0
        %536 = vmatpush.bf16.msra.mxu0 %v349
        %537 = vmatpush.bf16.msra.mxu0 %v345
        %538 = vmatmul.bf16.gmra.mxu0 %v360
        %v539 = vpop.f32.mrf.mxu0
        %v540 = vadd.f32 %v273, %v539
        %v541 = vpop.f32.mrf.mxu0
        %v542 = vadd.f32 %v273, %v541
        %543 = vmatmul.bf16.gmra.mxu0 %v363
        %v544 = vpop.f32.mrf.mxu0
        %v545 = vadd.f32 %v273, %v544
        %v546 = vpop.f32.mrf.mxu0
        %v547 = vadd.f32 %v273, %v546
        %548 = vmatmul.bf16.gmra.mxu0 %v366
        %v549 = vpop.f32.mrf.mxu0
        %v550 = vadd.f32 %v273, %v549
        %v551 = vpop.f32.mrf.mxu0
        %v552 = vadd.f32 %v273, %v551
        %553 = vmatmul.bf16.gmra.mxu0 %v369
        %v554 = vpop.f32.mrf.mxu0
        %v555 = vadd.f32 %v273, %v554
        %v556 = vpop.f32.mrf.mxu0
        %v557 = vadd.f32 %v273, %v556
        %558 = vmatmul.bf16.gmra.mxu0 %v372
        %v559 = vpop.f32.mrf.mxu0
        %v560 = vadd.f32 %v273, %v559
        %v561 = vpop.f32.mrf.mxu0
        %v562 = vadd.f32 %v273, %v561
        %563 = vmatmul.bf16.gmra.mxu0 %v375
        %v564 = vpop.f32.mrf.mxu0
        %v565 = vadd.f32 %v273, %v564
        %v566 = vpop.f32.mrf.mxu0
        %v567 = vadd.f32 %v273, %v566
        %568 = vmatmul.bf16.gmra.mxu0 %v378
        %v569 = vpop.f32.mrf.mxu0
        %v570 = vadd.f32 %v273, %v569
        %v571 = vpop.f32.mrf.mxu0
        %v572 = vadd.f32 %v273, %v571
        %573 = vmatmul.bf16.gmra.mxu0 %v381
        %v574 = vpop.f32.mrf.mxu0
        %v575 = vadd.f32 %v273, %v574
        %v576 = vpop.f32.mrf.mxu0
        %v577 = vadd.f32 %v273, %v576
        %578 = vdwg.mxu0
        %v579 = vmax.f32 %v393, 0.0
        %v580 = vmax.f32 %v442, 0.0
        %v581 = vmax.f32 %v491, 0.0
        %v582 = vmax.f32 %v540, 0.0
        %v583 = vmax.f32 %v395, 0.0
        %v584 = vmax.f32 %v444, 0.0
        %v585 = vmax.f32 %v493, 0.0
        %v586 = vmax.f32 %v542, 0.0
        %v587 = vmax.f32 %v398, 0.0
        %v588 = vmax.f32 %v447, 0.0
        %v589 = vmax.f32 %v496, 0.0
        %v590 = vmax.f32 %v545, 0.0
        %v591 = vmax.f32 %v400, 0.0
        %v592 = vmax.f32 %v449, 0.0
        %v593 = vmax.f32 %v498, 0.0
        %v594 = vmax.f32 %v547, 0.0
        %v595 = vmax.f32 %v403, 0.0
        %v596 = vmax.f32 %v452, 0.0
        %v597 = vmax.f32 %v501, 0.0
        %v598 = vmax.f32 %v550, 0.0
        %v599 = vmax.f32 %v405, 0.0
        %v600 = vmax.f32 %v454, 0.0
        %v601 = vmax.f32 %v503, 0.0
        %v602 = vmax.f32 %v552, 0.0
        %v603 = vmax.f32 %v408, 0.0
        %v604 = vmax.f32 %v457, 0.0
        %v605 = vmax.f32 %v506, 0.0
        %v606 = vmax.f32 %v555, 0.0
        %v607 = vmax.f32 %v410, 0.0
        %v608 = vmax.f32 %v459, 0.0
        %v609 = vmax.f32 %v508, 0.0
        %v610 = vmax.f32 %v557, 0.0
        %v611 = vmax.f32 %v413, 0.0
        %v612 = vmax.f32 %v462, 0.0
        %v613 = vmax.f32 %v511, 0.0
        %v614 = vmax.f32 %v560, 0.0
        %v615 = vmax.f32 %v415, 0.0
        %v616 = vmax.f32 %v464, 0.0
        %v617 = vmax.f32 %v513, 0.0
        %v618 = vmax.f32 %v562, 0.0
        %v619 = vmax.f32 %v418, 0.0
        %v620 = vmax.f32 %v467, 0.0
        %v621 = vmax.f32 %v516, 0.0
        %v622 = vmax.f32 %v565, 0.0
        %v623 = vmax.f32 %v420, 0.0
        %v624 = vmax.f32 %v469, 0.0
        %v625 = vmax.f32 %v518, 0.0
        %v626 = vmax.f32 %v567, 0.0
        %v627 = vmax.f32 %v423, 0.0
        %v628 = vmax.f32 %v472, 0.0
        %v629 = vmax.f32 %v521, 0.0
        %v630 = vmax.f32 %v570, 0.0
        %v631 = vmax.f32 %v425, 0.0
        %v632 = vmax.f32 %v474, 0.0
        %v633 = vmax.f32 %v523, 0.0
        %v634 = vmax.f32 %v572, 0.0
        %v635 = vmax.f32 %v428, 0.0
        %v636 = vmax.f32 %v477, 0.0
        %v637 = vmax.f32 %v526, 0.0
        %v638 = vmax.f32 %v575, 0.0
        %v639 = vmax.f32 %v430, 0.0
        %v640 = vmax.f32 %v479, 0.0
        %v641 = vmax.f32 %v528, 0.0
        %v642 = vmax.f32 %v577, 0.0
        %v643 = vpack.c.bf16 %v583, %v579
        %v644 = vpack.c.bf16 %v584, %v580
        %v645 = vpack.c.bf16 %v585, %v581
        %v646 = vpack.c.bf16 %v586, %v582
        %v647 = vpack.c.bf16 %v591, %v587
        %v648 = vpack.c.bf16 %v592, %v588
        %v649 = vpack.c.bf16 %v593, %v589
        %v650 = vpack.c.bf16 %v594, %v590
        %v651 = vpack.c.bf16 %v599, %v595
        %v652 = vpack.c.bf16 %v600, %v596
        %v653 = vpack.c.bf16 %v601, %v597
        %v654 = vpack.c.bf16 %v602, %v598
        %v655 = vpack.c.bf16 %v607, %v603
        %v656 = vpack.c.bf16 %v608, %v604
        %v657 = vpack.c.bf16 %v609, %v605
        %v658 = vpack.c.bf16 %v610, %v606
        %v659 = vpack.c.bf16 %v615, %v611
        %v660 = vpack.c.bf16 %v616, %v612
        %v661 = vpack.c.bf16 %v617, %v613
        %v662 = vpack.c.bf16 %v618, %v614
        %v663 = vpack.c.bf16 %v623, %v619
        %v664 = vpack.c.bf16 %v624, %v620
        %v665 = vpack.c.bf16 %v625, %v621
        %v666 = vpack.c.bf16 %v626, %v622
        %v667 = vpack.c.bf16 %v631, %v627
        %v668 = vpack.c.bf16 %v632, %v628
        %v669 = vpack.c.bf16 %v633, %v629
        %v670 = vpack.c.bf16 %v634, %v630
        %v671 = vpack.c.bf16 %v639, %v635
        %v672 = vpack.c.bf16 %v640, %v636
        %v673 = vpack.c.bf16 %v641, %v637
        %v674 = vpack.c.bf16 %v642, %v638
        %v675 = vld [vmem:[#allocation2] sm:$0xf]
        %v676 = vld [vmem:[#allocation2 + $0x4] sm:$0xf]
        %v677 = vld [vmem:[#allocation2 + $0x8] sm:$0xf]
        %v678 = vld [vmem:[#allocation2 + $0xc] sm:$0xf]
        %v679 = vld [vmem:[#allocation2 + $0x10] sm:$0xf]
        %v680 = vld [vmem:[#allocation2 + $0x14] sm:$0xf]
        %v681 = vld [vmem:[#allocation2 + $0x18] sm:$0xf]
        %v682 = vld [vmem:[#allocation2 + $0x1c] sm:$0xf]
        %v683 = vld [vmem:[#allocation2 + $0x20] sm:$0xf]
        %v684 = vld [vmem:[#allocation2 + $0x24] sm:$0xf]
        %v685 = vld [vmem:[#allocation2 + $0x28] sm:$0xf]
        %v686 = vld [vmem:[#allocation2 + $0x2c] sm:$0xf]
        %v687 = vld [vmem:[#allocation2 + $0x30] sm:$0xf]
        %v688 = vld [vmem:[#allocation2 + $0x34] sm:$0xf]
        %v689 = vld [vmem:[#allocation2 + $0x38] sm:$0xf]
        %v690 = vld [vmem:[#allocation2 + $0x3c] sm:$0xf]
        %v691 = vld [vmem:[#allocation2 + $0x40] sm:$0xf]
        %v692 = vld [vmem:[#allocation2 + $0x44] sm:$0xf]
        %v693 = vld [vmem:[#allocation2 + $0x48] sm:$0xf]
        %v694 = vld [vmem:[#allocation2 + $0x4c] sm:$0xf]
        %v695 = vld [vmem:[#allocation2 + $0x50] sm:$0xf]
        %v696 = vld [vmem:[#allocation2 + $0x54] sm:$0xf]
        %v697 = vld [vmem:[#allocation2 + $0x58] sm:$0xf]
        %v698 = vld [vmem:[#allocation2 + $0x5c] sm:$0xf]
        %v699 = vld [vmem:[#allocation2 + $0x60] sm:$0xf]
        %v700 = vld [vmem:[#allocation2 + $0x64] sm:$0xf]
        %v701 = vld [vmem:[#allocation2 + $0x68] sm:$0xf]
        %v702 = vld [vmem:[#allocation2 + $0x6c] sm:$0xf]
        %v703 = vld [vmem:[#allocation2 + $0x70] sm:$0xf]
        %v704 = vld [vmem:[#allocation2 + $0x74] sm:$0xf]
        %v705 = vld [vmem:[#allocation2 + $0x78] sm:$0xf]
        %v706 = vld [vmem:[#allocation2 + $0x7c] sm:$0xf]
        %v707 = vld [vmem:[#allocation2 + $0x80] sm:$0xf]
        %v708 = vld [vmem:[#allocation2 + $0x84] sm:$0xf]
        %v709 = vld [vmem:[#allocation2 + $0x88] sm:$0xf]
        %v710 = vld [vmem:[#allocation2 + $0x8c] sm:$0xf]
        %v711 = vld [vmem:[#allocation2 + $0x90] sm:$0xf]
        %v712 = vld [vmem:[#allocation2 + $0x94] sm:$0xf]
        %v713 = vld [vmem:[#allocation2 + $0x98] sm:$0xf]
        %v714 = vld [vmem:[#allocation2 + $0x9c] sm:$0xf]
        %v715 = vld [vmem:[#allocation2 + $0xa0] sm:$0xf]
        %v716 = vld [vmem:[#allocation2 + $0xa4] sm:$0xf]
        %v717 = vld [vmem:[#allocation2 + $0xa8] sm:$0xf]
        %v718 = vld [vmem:[#allocation2 + $0xac] sm:$0xf]
        %v719 = vld [vmem:[#allocation2 + $0xb0] sm:$0xf]
        %v720 = vld [vmem:[#allocation2 + $0xb4] sm:$0xf]
        %v721 = vld [vmem:[#allocation2 + $0xb8] sm:$0xf]
        %v722 = vld [vmem:[#allocation2 + $0xbc] sm:$0xf]
        %v723 = vld [vmem:[#allocation2 + $0xc0] sm:$0xf]
        %v724 = vld [vmem:[#allocation2 + $0xc4] sm:$0xf]
        %v725 = vld [vmem:[#allocation2 + $0xc8] sm:$0xf]
        %v726 = vld [vmem:[#allocation2 + $0xcc] sm:$0xf]
        %v727 = vld [vmem:[#allocation2 + $0xd0] sm:$0xf]
        %v728 = vld [vmem:[#allocation2 + $0xd4] sm:$0xf]
        %v729 = vld [vmem:[#allocation2 + $0xd8] sm:$0xf]
        %v730 = vld [vmem:[#allocation2 + $0xdc] sm:$0xf]
        %v731 = vld [vmem:[#allocation2 + $0xe0] sm:$0xf]
        %v732 = vld [vmem:[#allocation2 + $0xe4] sm:$0xf]
        %v733 = vld [vmem:[#allocation2 + $0xe8] sm:$0xf]
        %v734 = vld [vmem:[#allocation2 + $0xec] sm:$0xf]
        %v735 = vld [vmem:[#allocation2 + $0xf0] sm:$0xf]
        %v736 = vld [vmem:[#allocation2 + $0xf4] sm:$0xf]
        %v737 = vld [vmem:[#allocation2 + $0xf8] sm:$0xf]
        %v738 = vld [vmem:[#allocation2 + $0xfc] sm:$0xf]
        %v739 = vld [vmem:[%s4] sm:$0x1]
        %v741 = vperm.slane %v739, 0
        %v807 = vunpack.c.l.b16 %v675
        %v808 = vunpack.c.l.b16 %v676
        %v809 = vunpack.c.l.b16 %v677
        %v810 = vunpack.c.l.b16 %v678
        %v811 = vunpack.c.l.b16 %v679
        %v812 = vunpack.c.l.b16 %v680
        %v813 = vunpack.c.l.b16 %v681
        %v814 = vunpack.c.l.b16 %v682
        %v815 = vunpack.c.l.b16 %v683
        %v816 = vunpack.c.l.b16 %v684
        %v817 = vunpack.c.l.b16 %v685
        %v818 = vunpack.c.l.b16 %v686
        %v819 = vunpack.c.l.b16 %v687
        %v820 = vunpack.c.l.b16 %v688
        %v821 = vunpack.c.l.b16 %v689
        %v822 = vunpack.c.l.b16 %v690
        %v823 = vunpack.c.l.b16 %v691
        %v824 = vunpack.c.l.b16 %v692
        %v825 = vunpack.c.l.b16 %v693
        %v826 = vunpack.c.l.b16 %v694
        %v827 = vunpack.c.l.b16 %v695
        %v828 = vunpack.c.l.b16 %v696
        %v829 = vunpack.c.l.b16 %v697
        %v830 = vunpack.c.l.b16 %v698
        %v831 = vunpack.c.l.b16 %v699
        %v832 = vunpack.c.l.b16 %v700
        %v833 = vunpack.c.l.b16 %v701
        %v834 = vunpack.c.l.b16 %v702
        %v835 = vunpack.c.l.b16 %v703
        %v836 = vunpack.c.l.b16 %v704
        %v837 = vunpack.c.l.b16 %v705
        %v838 = vunpack.c.l.b16 %v706
        %v839 = vunpack.c.l.b16 %v707
        %v840 = vunpack.c.l.b16 %v708
        %v841 = vunpack.c.l.b16 %v709
        %v842 = vunpack.c.l.b16 %v710
        %v843 = vunpack.c.l.b16 %v711
        %v844 = vunpack.c.l.b16 %v712
        %v845 = vunpack.c.l.b16 %v713
        %v846 = vunpack.c.l.b16 %v714
        %v847 = vunpack.c.l.b16 %v715
        %v848 = vunpack.c.l.b16 %v716
        %v849 = vunpack.c.l.b16 %v717
        %v850 = vunpack.c.l.b16 %v718
        %v851 = vunpack.c.l.b16 %v719
        %v852 = vunpack.c.l.b16 %v720
        %v853 = vunpack.c.l.b16 %v721
        %v854 = vunpack.c.l.b16 %v722
        %v855 = vunpack.c.l.b16 %v723
        %v856 = vunpack.c.l.b16 %v724
        %v857 = vunpack.c.l.b16 %v725
        %v858 = vunpack.c.l.b16 %v726
        %v859 = vunpack.c.l.b16 %v727
        %v860 = vunpack.c.l.b16 %v728
        %v861 = vunpack.c.l.b16 %v729
        %v862 = vunpack.c.l.b16 %v730
        %v863 = vunpack.c.l.b16 %v731
        %v864 = vunpack.c.l.b16 %v732
        %v865 = vunpack.c.l.b16 %v733
        %v866 = vunpack.c.l.b16 %v734
        %v867 = vunpack.c.l.b16 %v735
        %v868 = vunpack.c.l.b16 %v736
        %v869 = vunpack.c.l.b16 %v737
        %v870 = vunpack.c.l.b16 %v738
        %v871 = vpack.c.b16 %v808, %v807
        %v872 = vpack.c.b16 %v810, %v809
        %v873 = vpack.c.b16 %v812, %v811
        %v874 = vpack.c.b16 %v814, %v813
        %v875 = vpack.c.b16 %v816, %v815
        %v876 = vpack.c.b16 %v818, %v817
        %v877 = vpack.c.b16 %v820, %v819
        %v878 = vpack.c.b16 %v822, %v821
        %v879 = vpack.c.b16 %v824, %v823
        %v880 = vpack.c.b16 %v826, %v825
        %v881 = vpack.c.b16 %v828, %v827
        %v882 = vpack.c.b16 %v830, %v829
        %v883 = vpack.c.b16 %v832, %v831
        %v884 = vpack.c.b16 %v834, %v833
        %v885 = vpack.c.b16 %v836, %v835
        %v886 = vpack.c.b16 %v838, %v837
        %v887 = vpack.c.b16 %v840, %v839
        %v888 = vpack.c.b16 %v842, %v841
        %v889 = vpack.c.b16 %v844, %v843
        %v890 = vpack.c.b16 %v846, %v845
        %v891 = vpack.c.b16 %v848, %v847
        %v892 = vpack.c.b16 %v850, %v849
        %v893 = vpack.c.b16 %v852, %v851
        %v894 = vpack.c.b16 %v854, %v853
        %v895 = vpack.c.b16 %v856, %v855
        %v896 = vpack.c.b16 %v858, %v857
        %v897 = vpack.c.b16 %v860, %v859
        %v898 = vpack.c.b16 %v862, %v861
        %v899 = vpack.c.b16 %v864, %v863
        %v900 = vpack.c.b16 %v866, %v865
        %v901 = vpack.c.b16 %v868, %v867
        %v902 = vpack.c.b16 %v870, %v869
        %935 = vmatpush.bf16.msra.mxu0 %v878
        %936 = vmatpush.bf16.msra.mxu0 %v877
        %937 = vmatpush.bf16.msra.mxu0 %v876
        %938 = vmatpush.bf16.msra.mxu0 %v875
        %939 = vmatpush.bf16.msra.mxu0 %v874
        %940 = vmatpush.bf16.msra.mxu0 %v873
        %941 = vmatpush.bf16.msra.mxu0 %v872
        %942 = vmatpush.bf16.msra.mxu0 %v871
        %943 = vmatmul.bf16.gmra.mxu0 %v643
        %v944 = vpop.f32.mrf.mxu0
        %v945 = vadd.f32 %v741, %v944
        %v946 = vpop.f32.mrf.mxu0
        %v947 = vadd.f32 %v741, %v946
        %948 = vmatmul.bf16.gmra.mxu0 %v647
        %v949 = vpop.f32.mrf.mxu0
        %v950 = vadd.f32 %v741, %v949
        %v951 = vpop.f32.mrf.mxu0
        %v952 = vadd.f32 %v741, %v951
        %953 = vmatmul.bf16.gmra.mxu0 %v651
        %v954 = vpop.f32.mrf.mxu0
        %v955 = vadd.f32 %v741, %v954
        %v956 = vpop.f32.mrf.mxu0
        %v957 = vadd.f32 %v741, %v956
        %958 = vmatmul.bf16.gmra.mxu0 %v655
        %v959 = vpop.f32.mrf.mxu0
        %v960 = vadd.f32 %v741, %v959
        %v961 = vpop.f32.mrf.mxu0
        %v962 = vadd.f32 %v741, %v961
        %963 = vmatmul.bf16.gmra.mxu0 %v659
        %v964 = vpop.f32.mrf.mxu0
        %v965 = vadd.f32 %v741, %v964
        %v966 = vpop.f32.mrf.mxu0
        %v967 = vadd.f32 %v741, %v966
        %968 = vmatmul.bf16.gmra.mxu0 %v663
        %v969 = vpop.f32.mrf.mxu0
        %v970 = vadd.f32 %v741, %v969
        %v971 = vpop.f32.mrf.mxu0
        %v972 = vadd.f32 %v741, %v971
        %973 = vmatmul.bf16.gmra.mxu0 %v667
        %v974 = vpop.f32.mrf.mxu0
        %v975 = vadd.f32 %v741, %v974
        %v976 = vpop.f32.mrf.mxu0
        %v977 = vadd.f32 %v741, %v976
        %978 = vmatmul.bf16.gmra.mxu0 %v671
        %v979 = vpop.f32.mrf.mxu0
        %v980 = vadd.f32 %v741, %v979
        %v981 = vpop.f32.mrf.mxu0
        %v982 = vadd.f32 %v741, %v981
        %983 = vdwg.mxu0
        %984 = vmatpush.bf16.msra.mxu0 %v886
        %985 = vmatpush.bf16.msra.mxu0 %v885
        %986 = vmatpush.bf16.msra.mxu0 %v884
        %987 = vmatpush.bf16.msra.mxu0 %v883
        %988 = vmatpush.bf16.msra.mxu0 %v882
        %989 = vmatpush.bf16.msra.mxu0 %v881
        %990 = vmatpush.bf16.msra.mxu0 %v880
        %991 = vmatpush.bf16.msra.mxu0 %v879
        %992 = vmatmul.bf16.gmra.mxu0 %v644
        %v993 = vpop.f32.mrf.mxu0
        %v994 = vadd.f32 %v945, %v993
        %v995 = vpop.f32.mrf.mxu0
        %v996 = vadd.f32 %v947, %v995
        %997 = vmatmul.bf16.gmra.mxu0 %v648
        %v998 = vpop.f32.mrf.mxu0
        %v999 = vadd.f32 %v950, %v998
        %v1000 = vpop.f32.mrf.mxu0
        %v1001 = vadd.f32 %v952, %v1000
        %1002 = vmatmul.bf16.gmra.mxu0 %v652
        %v1003 = vpop.f32.mrf.mxu0
        %v1004 = vadd.f32 %v955, %v1003
        %v1005 = vpop.f32.mrf.mxu0
        %v1006 = vadd.f32 %v957, %v1005
        %1007 = vmatmul.bf16.gmra.mxu0 %v656
        %v1008 = vpop.f32.mrf.mxu0
        %v1009 = vadd.f32 %v960, %v1008
        %v1010 = vpop.f32.mrf.mxu0
        %v1011 = vadd.f32 %v962, %v1010
        %1012 = vmatmul.bf16.gmra.mxu0 %v660
        %v1013 = vpop.f32.mrf.mxu0
        %v1014 = vadd.f32 %v965, %v1013
        %v1015 = vpop.f32.mrf.mxu0
        %v1016 = vadd.f32 %v967, %v1015
        %1017 = vmatmul.bf16.gmra.mxu0 %v664
        %v1018 = vpop.f32.mrf.mxu0
        %v1019 = vadd.f32 %v970, %v1018
        %v1020 = vpop.f32.mrf.mxu0
        %v1021 = vadd.f32 %v972, %v1020
        %1022 = vmatmul.bf16.gmra.mxu0 %v668
        %v1023 = vpop.f32.mrf.mxu0
        %v1024 = vadd.f32 %v975, %v1023
        %v1025 = vpop.f32.mrf.mxu0
        %v1026 = vadd.f32 %v977, %v1025
        %1027 = vmatmul.bf16.gmra.mxu0 %v672
        %v1028 = vpop.f32.mrf.mxu0
        %v1029 = vadd.f32 %v980, %v1028
        %v1030 = vpop.f32.mrf.mxu0
        %v1031 = vadd.f32 %v982, %v1030
        %1032 = vdwg.mxu0
        %1033 = vmatpush.bf16.msra.mxu0 %v894
        %1034 = vmatpush.bf16.msra.mxu0 %v893
        %1035 = vmatpush.bf16.msra.mxu0 %v892
        %1036 = vmatpush.bf16.msra.mxu0 %v891
        %1037 = vmatpush.bf16.msra.mxu0 %v890
        %1038 = vmatpush.bf16.msra.mxu0 %v889
        %1039 = vmatpush.bf16.msra.mxu0 %v888
        %1040 = vmatpush.bf16.msra.mxu0 %v887
        %1041 = vmatmul.bf16.gmra.mxu0 %v645
        %v1042 = vpop.f32.mrf.mxu0
        %v1043 = vadd.f32 %v994, %v1042
        %v1044 = vpop.f32.mrf.mxu0
        %v1045 = vadd.f32 %v996, %v1044
        %1046 = vmatmul.bf16.gmra.mxu0 %v649
        %v1047 = vpop.f32.mrf.mxu0
        %v1048 = vadd.f32 %v999, %v1047
        %v1049 = vpop.f32.mrf.mxu0
        %v1050 = vadd.f32 %v1001, %v1049
        %1051 = vmatmul.bf16.gmra.mxu0 %v653
        %v1052 = vpop.f32.mrf.mxu0
        %v1053 = vadd.f32 %v1004, %v1052
        %v1054 = vpop.f32.mrf.mxu0
        %v1055 = vadd.f32 %v1006, %v1054
        %1056 = vmatmul.bf16.gmra.mxu0 %v657
        %v1057 = vpop.f32.mrf.mxu0
        %v1058 = vadd.f32 %v1009, %v1057
        %v1059 = vpop.f32.mrf.mxu0
        %v1060 = vadd.f32 %v1011, %v1059
        %1061 = vmatmul.bf16.gmra.mxu0 %v661
        %v1062 = vpop.f32.mrf.mxu0
        %v1063 = vadd.f32 %v1014, %v1062
        %v1064 = vpop.f32.mrf.mxu0
        %v1065 = vadd.f32 %v1016, %v1064
        %1066 = vmatmul.bf16.gmra.mxu0 %v665
        %v1067 = vpop.f32.mrf.mxu0
        %v1068 = vadd.f32 %v1019, %v1067
        %v1069 = vpop.f32.mrf.mxu0
        %v1070 = vadd.f32 %v1021, %v1069
        %1071 = vmatmul.bf16.gmra.mxu0 %v669
        %v1072 = vpop.f32.mrf.mxu0
        %v1073 = vadd.f32 %v1024, %v1072
        %v1074 = vpop.f32.mrf.mxu0
        %v1075 = vadd.f32 %v1026, %v1074
        %1076 = vmatmul.bf16.gmra.mxu0 %v673
        %v1077 = vpop.f32.mrf.mxu0
        %v1078 = vadd.f32 %v1029, %v1077
        %v1079 = vpop.f32.mrf.mxu0
        %v1080 = vadd.f32 %v1031, %v1079
        %1081 = vdwg.mxu0
        %1082 = vmatpush.bf16.msra.mxu0 %v902
        %1083 = vmatpush.bf16.msra.mxu0 %v901
        %1084 = vmatpush.bf16.msra.mxu0 %v900
        %1085 = vmatpush.bf16.msra.mxu0 %v899
        %1086 = vmatpush.bf16.msra.mxu0 %v898
        %1087 = vmatpush.bf16.msra.mxu0 %v897
        %1088 = vmatpush.bf16.msra.mxu0 %v896
        %1089 = vmatpush.bf16.msra.mxu0 %v895
        %1090 = vmatmul.bf16.gmra.mxu0 %v646
        %v1091 = vpop.f32.mrf.mxu0
        %v1092 = vadd.f32 %v1043, %v1091
        %v1093 = vpop.f32.mrf.mxu0
        %v1094 = vadd.f32 %v1045, %v1093
        %1095 = vmatmul.bf16.gmra.mxu0 %v650
        %v1096 = vpop.f32.mrf.mxu0
        %v1097 = vadd.f32 %v1048, %v1096
        %v1098 = vpop.f32.mrf.mxu0
        %v1099 = vadd.f32 %v1050, %v1098
        %1100 = vmatmul.bf16.gmra.mxu0 %v654
        %v1101 = vpop.f32.mrf.mxu0
        %v1102 = vadd.f32 %v1053, %v1101
        %v1103 = vpop.f32.mrf.mxu0
        %v1104 = vadd.f32 %v1055, %v1103
        %1105 = vmatmul.bf16.gmra.mxu0 %v658
        %v1106 = vpop.f32.mrf.mxu0
        %v1107 = vadd.f32 %v1058, %v1106
        %v1108 = vpop.f32.mrf.mxu0
        %v1109 = vadd.f32 %v1060, %v1108
        %1110 = vmatmul.bf16.gmra.mxu0 %v662
        %v1111 = vpop.f32.mrf.mxu0
        %v1112 = vadd.f32 %v1063, %v1111
        %v1113 = vpop.f32.mrf.mxu0
        %v1114 = vadd.f32 %v1065, %v1113
        %1115 = vmatmul.bf16.gmra.mxu0 %v666
        %v1116 = vpop.f32.mrf.mxu0
        %v1117 = vadd.f32 %v1068, %v1116
        %v1118 = vpop.f32.mrf.mxu0
        %v1119 = vadd.f32 %v1070, %v1118
        %1120 = vmatmul.bf16.gmra.mxu0 %v670
        %v1121 = vpop.f32.mrf.mxu0
        %v1122 = vadd.f32 %v1073, %v1121
        %v1123 = vpop.f32.mrf.mxu0
        %v1124 = vadd.f32 %v1075, %v1123
        %1125 = vmatmul.bf16.gmra.mxu0 %v674
        %v1126 = vpop.f32.mrf.mxu0
        %v1127 = vadd.f32 %v1078, %v1126
        %v1128 = vpop.f32.mrf.mxu0
        %v1129 = vadd.f32 %v1080, %v1128
        %1130 = vdwg.mxu0
        %1131 = vmax.xlane.f32.xlu0 %v1092
        %v1132 = vpop.xlane.xlu0 %1131
        %1133 = vmax.xlane.f32.xlu0 %v1094
        %v1134 = vpop.xlane.xlu0 %1133
        %1135 = vmax.xlane.f32.xlu0 %v1097
        %v1136 = vpop.xlane.xlu0 %1135
        %1137 = vmax.xlane.f32.xlu0 %v1099
        %v1138 = vpop.xlane.xlu0 %1137
        %1139 = vmax.xlane.f32.xlu0 %v1102
        %v1140 = vpop.xlane.xlu0 %1139
        %1141 = vmax.xlane.f32.xlu0 %v1104
        %v1142 = vpop.xlane.xlu0 %1141
        %1143 = vmax.xlane.f32.xlu0 %v1107
        %v1144 = vpop.xlane.xlu0 %1143
        %1145 = vmax.xlane.f32.xlu0 %v1109
        %v1146 = vpop.xlane.xlu0 %1145
        %1147 = vmax.xlane.f32.xlu0 %v1112
        %v1148 = vpop.xlane.xlu0 %1147
        %1149 = vmax.xlane.f32.xlu0 %v1114
        %v1150 = vpop.xlane.xlu0 %1149
        %1151 = vmax.xlane.f32.xlu0 %v1117
        %v1152 = vpop.xlane.xlu0 %1151
        %1153 = vmax.xlane.f32.xlu0 %v1119
        %v1154 = vpop.xlane.xlu0 %1153
        %1155 = vmax.xlane.f32.xlu0 %v1122
        %v1156 = vpop.xlane.xlu0 %1155
        %1157 = vmax.xlane.f32.xlu0 %v1124
        %v1158 = vpop.xlane.xlu0 %1157
        %1159 = vmax.xlane.f32.xlu0 %v1127
        %v1160 = vpop.xlane.xlu0 %1159
        %1161 = vmax.xlane.f32.xlu0 %v1129
        %v1162 = vpop.xlane.xlu0 %1161
        %v1163 = vsub.f32 %v1092, %v1132
        %v1164 = vsub.f32 %v1094, %v1134
        %v1165 = vsub.f32 %v1097, %v1136
        %v1166 = vsub.f32 %v1099, %v1138
        %v1167 = vsub.f32 %v1102, %v1140
        %v1168 = vsub.f32 %v1104, %v1142
        %v1169 = vsub.f32 %v1107, %v1144
        %v1170 = vsub.f32 %v1109, %v1146
        %v1171 = vsub.f32 %v1112, %v1148
        %v1172 = vsub.f32 %v1114, %v1150
        %v1173 = vsub.f32 %v1117, %v1152
        %v1174 = vsub.f32 %v1119, %v1154
        %v1175 = vsub.f32 %v1122, %v1156
        %v1176 = vsub.f32 %v1124, %v1158
        %v1177 = vsub.f32 %v1127, %v1160
        %v1178 = vsub.f32 %v1129, %v1162
        %v1179 = vmul.f32 %v1163, 1.442695
        %v1180 = vpow.pop %v1179
        %v1181 = vmul.f32 %v1164, 1.442695
        %v1182 = vpow.pop %v1181
        %v1183 = vmul.f32 %v1165, 1.442695
        %v1184 = vpow.pop %v1183
        %v1185 = vmul.f32 %v1166, 1.442695
        %v1186 = vpow.pop %v1185
        %v1187 = vmul.f32 %v1167, 1.442695
        %v1188 = vpow.pop %v1187
        %v1189 = vmul.f32 %v1168, 1.442695
        %v1190 = vpow.pop %v1189
        %v1191 = vmul.f32 %v1169, 1.442695
        %v1192 = vpow.pop %v1191
        %v1193 = vmul.f32 %v1170, 1.442695
        %v1194 = vpow.pop %v1193
        %v1195 = vmul.f32 %v1171, 1.442695
        %v1196 = vpow.pop %v1195
        %v1197 = vmul.f32 %v1172, 1.442695
        %v1198 = vpow.pop %v1197
        %v1199 = vmul.f32 %v1173, 1.442695
        %v1200 = vpow.pop %v1199
        %v1201 = vmul.f32 %v1174, 1.442695
        %v1202 = vpow.pop %v1201
        %v1203 = vmul.f32 %v1175, 1.442695
        %v1204 = vpow.pop %v1203
        %v1205 = vmul.f32 %v1176, 1.442695
        %v1206 = vpow.pop %v1205
        %v1207 = vmul.f32 %v1177, 1.442695
        %v1208 = vpow.pop %v1207
        %v1209 = vmul.f32 %v1178, 1.442695
        %v1210 = vpow.pop %v1209
        %1211 = vadd.xlane.f32.xlu0 %v1180
        %v1212 = vpop.xlane.xlu0 %1211
        %1213 = vadd.xlane.f32.xlu0 %v1182
        %v1214 = vpop.xlane.xlu0 %1213
        %1215 = vadd.xlane.f32.xlu0 %v1184
        %v1216 = vpop.xlane.xlu0 %1215
        %1217 = vadd.xlane.f32.xlu0 %v1186
        %v1218 = vpop.xlane.xlu0 %1217
        %1219 = vadd.xlane.f32.xlu0 %v1188
        %v1220 = vpop.xlane.xlu0 %1219
        %1221 = vadd.xlane.f32.xlu0 %v1190
        %v1222 = vpop.xlane.xlu0 %1221
        %1223 = vadd.xlane.f32.xlu0 %v1192
        %v1224 = vpop.xlane.xlu0 %1223
        %1225 = vadd.xlane.f32.xlu0 %v1194
        %v1226 = vpop.xlane.xlu0 %1225
        %1227 = vadd.xlane.f32.xlu0 %v1196
        %v1228 = vpop.xlane.xlu0 %1227
        %1229 = vadd.xlane.f32.xlu0 %v1198
        %v1230 = vpop.xlane.xlu0 %1229
        %1231 = vadd.xlane.f32.xlu0 %v1200
        %v1232 = vpop.xlane.xlu0 %1231
        %1233 = vadd.xlane.f32.xlu0 %v1202
        %v1234 = vpop.xlane.xlu0 %1233
        %1235 = vadd.xlane.f32.xlu0 %v1204
        %v1236 = vpop.xlane.xlu0 %1235
        %1237 = vadd.xlane.f32.xlu0 %v1206
        %v1238 = vpop.xlane.xlu0 %1237
        %1239 = vadd.xlane.f32.xlu0 %v1208
        %v1240 = vpop.xlane.xlu0 %1239
        %1241 = vadd.xlane.f32.xlu0 %v1210
        %v1242 = vpop.xlane.xlu0 %1241
        %v1243 = vrcp.pop %v1212
        %v1244 = vrcp.pop %v1214
        %v1245 = vrcp.pop %v1216
        %v1246 = vrcp.pop %v1218
        %v1247 = vrcp.pop %v1220
        %v1248 = vrcp.pop %v1222
        %v1249 = vrcp.pop %v1224
        %v1250 = vrcp.pop %v1226
        %v1251 = vrcp.pop %v1228
        %v1252 = vrcp.pop %v1230
        %v1253 = vrcp.pop %v1232
        %v1254 = vrcp.pop %v1234
        %v1255 = vrcp.pop %v1236
        %v1256 = vrcp.pop %v1238
        %v1257 = vrcp.pop %v1240
        %v1258 = vrcp.pop %v1242
        %v1259 = vmul.f32 %v1180, %v1243
        %v1260 = vmul.f32 %v1182, %v1244
        %v1261 = vmul.f32 %v1184, %v1245
        %v1262 = vmul.f32 %v1186, %v1246
        %v1263 = vmul.f32 %v1188, %v1247
        %v1264 = vmul.f32 %v1190, %v1248
        %v1265 = vmul.f32 %v1192, %v1249
        %v1266 = vmul.f32 %v1194, %v1250
        %v1267 = vmul.f32 %v1196, %v1251
        %v1268 = vmul.f32 %v1198, %v1252
        %v1269 = vmul.f32 %v1200, %v1253
        %v1270 = vmul.f32 %v1202, %v1254
        %v1271 = vmul.f32 %v1204, %v1255
        %v1272 = vmul.f32 %v1206, %v1256
        %v1273 = vmul.f32 %v1208, %v1257
        %v1274 = vmul.f32 %v1210, %v1258
        %1275 = vst [vmem:[%s235] sm:$0xff] %v1259
        %1276 = vst [vmem:[%s235 + $0x8] sm:$0xff] %v1260
        %1277 = vst [vmem:[%s235 + $0x10] sm:$0xff] %v1261
        %1278 = vst [vmem:[%s235 + $0x18] sm:$0xff] %v1262
        %1279 = vst [vmem:[%s235 + $0x20] sm:$0xff] %v1263
        %1280 = vst [vmem:[%s235 + $0x28] sm:$0xff] %v1264
        %1281 = vst [vmem:[%s235 + $0x30] sm:$0xff] %v1265
        %1282 = vst [vmem:[%s235 + $0x38] sm:$0xff] %v1266
        %1283 = vst [vmem:[%s235 + $0x40] sm:$0xff] %v1267
        %1284 = vst [vmem:[%s235 + $0x48] sm:$0xff] %v1268
        %1285 = vst [vmem:[%s235 + $0x50] sm:$0xff] %v1269
        %1286 = vst [vmem:[%s235 + $0x58] sm:$0xff] %v1270
        %1287 = vst [vmem:[%s235 + $0x60] sm:$0xff] %v1271
        %1288 = vst [vmem:[%s235 + $0x68] sm:$0xff] %v1272
        %1289 = vst [vmem:[%s235 + $0x70] sm:$0xff] %v1273
        %1290 = vst [vmem:[%s235 + $0x78] sm:$0xff] %v1274
        %s1291 = sand.u32 %s138, 1
        %s1292 = scalar_lea.sflag [#allocation4], %s1291
        %s1293 = sand.u32 %s138, 1
        %s1294 = smul.addr %s1293, 128
        %s1295 = scalar_lea.vmem [#allocation5], %s1294
        // Predicated region
        $region45: #{tpu_custom_call.1} parent=39 // pred_check
          %p1296 = pneg %p148
        $region46: #{tpu_custom_call.1} parent=39 // pred_check_branch
          %1298 = sbr.rel (%p1296) target = $region48
        $region47: #{tpu_custom_call.1} parent=39 // pred_region
          %s1299 = smul.u32 16, %s20
          %1301 = vsyncadd %s1292, 0
          %s1302 = smul.addr %s1299, 8
          %s1303 = scalar_lea.hbm %s5, %s1302
          %s1304 = sshll.u32 %s1295, 4
          %s1305 = int_to_ptr.vmem [resolvable:$true] %s1304
          %s1306 = sshll.u32 %s1303, 4
          %s1307 = int_to_ptr.hbm [resolvable:$true] %s1306
          %1312 = dma.vmem_to_hbm [thread:$0]  %s1305, 2048, %s1307, %s1292, 128, 128, 8
        $region48: #{tpu_custom_call.1} parent=39 // pred_fallthru
          _
      $region40: #{tpu_custom_call.1} parent=5 // pred_fallthru
        _
      %p1313 = scmp.le.s32.totalorder 2, %s15
      // Predicated region
      $region49: #{tpu_custom_call.1} parent=5 // pred_check
        %p1314 = pneg %p1313
      $region50: #{tpu_custom_call.1} parent=5 // pred_check_branch
        %1316 = sbr.rel (%p1314) target = $region52
      $region51: #{tpu_custom_call.1} parent=5 // pred_region
        %s1317 = ssub.s32 %s15, 2
        // Predicated region
        $region53: #{tpu_custom_call.1} parent=51 // pred_check
          %p1318 = pneg %p154
        $region54: #{tpu_custom_call.1} parent=51 // pred_check_branch
          %1320 = sbr.rel (%p1318) target = $region56
        $region55: #{tpu_custom_call.1} parent=51 // pred_region
          %s1321 = sand.u32 %s139, 1
          %s1322 = scalar_lea.sflag [#allocation4], %s1321
          %s1323 = sand.u32 %s139, 1
          %s1324 = smul.addr %s1323, 128
          %s1325 = scalar_lea.vmem [#allocation5], %s1324
          %1327 = dma.done %s1322, 2048
        $region56: #{tpu_custom_call.1} parent=51 // pred_fallthru
          _
      $region52: #{tpu_custom_call.1} parent=5 // pred_fallthru
        _
    $region6: #{tpu_custom_call.1} parent=1 // loop_footer
      %s19 = sadd.s32 1, %s15
    $region7: #{tpu_custom_call.1} parent=1 // loop_footer_branch
      %14 = sbr.rel target = $region3
    $region8: #{tpu_custom_call.1} parent=1 // loop_exit
      _
    %1328 = vsyncpa [#allocation3], 1
    %s1329 = scalar_lea.sflag [#allocation3], 1
    %1330 = vsyncpa %s1329, 1
    %1331 = vsyncpa [#allocation4], 1
    %s1332 = scalar_lea.sflag [#allocation4], 1
    %1333 = vsyncpa %s1332, 1

</llo_original>
